<compile_context>
chip_gen: v5e
topology: v5e:2x2
jax: 0.10.0
libtpu: 0.0.40
codegen_flags: <defaults>
</compile_context>

<pallas_src>
import math

import numpy as np

import jax
import jax.numpy as jnp
from jax.experimental import pallas as pl
from jax.experimental.pallas import tpu as pltpu


# -----------------------------------------------------------------------------
# Fixed transforms (host-side numpy, deterministic): periodic Hann window,
# window-folded rDFT bases, HTK mel filterbank, ortho DCT-II.  These mirror
# what torchaudio's MFCC module builds in __init__ -- no learned parameters.
# -----------------------------------------------------------------------------
def _hann_window(n_fft):
    n = np.arange(n_fft, dtype=np.float64)
    return 0.5 - 0.5 * np.cos(2.0 * np.pi * n / n_fft)        # periodic Hann


def _windowed_dft(n_fft, n_freq):
    """(n_fft, n_freq) cos/sin rDFT bases with the Hann window pre-folded."""
    win = _hann_window(n_fft)[:, None]
    n = np.arange(n_fft, dtype=np.float64)[:, None]
    k = np.arange(n_freq, dtype=np.float64)[None, :]
    ang = 2.0 * np.pi * n * k / n_fft
    # Sign of the imaginary basis does not matter: only re^2 + im^2 is used.
    return win * np.cos(ang), win * np.sin(ang)


def _mel_filterbank(n_freq, n_mels, sample_rate, f_min, f_max):
    """torchaudio-style (htk scale, norm=None) triangular filterbank."""
    all_freqs = np.linspace(0.0, sample_rate / 2.0, n_freq)
    hz_to_mel = lambda f: 2595.0 * np.log10(1.0 + f / 700.0)
    mel_to_hz = lambda m: 700.0 * (10.0 ** (m / 2595.0) - 1.0)
    m_pts = np.linspace(hz_to_mel(f_min), hz_to_mel(f_max), n_mels + 2)
    f_pts = mel_to_hz(m_pts)
    f_diff = np.diff(f_pts)                                    # (n_mels + 1,)
    slopes = f_pts[None, :] - all_freqs[:, None]               # (n_freq, n_mels+2)
    down = -slopes[:, :-2] / f_diff[:-1]
    up = slopes[:, 2:] / f_diff[1:]
    return np.maximum(0.0, np.minimum(down, up))               # (n_freq, n_mels)


def _dct_matrix(n_mfcc, n_mels):
    """torchaudio F.create_dct(n_mfcc, n_mels, norm='ortho') -> (n_mels, n_mfcc)."""
    n = np.arange(n_mels, dtype=np.float64)
    k = np.arange(n_mfcc, dtype=np.float64)[:, None]
    dct = np.cos(np.pi / n_mels * (n + 0.5) * k)               # (n_mfcc, n_mels)
    dct[0] *= 1.0 / math.sqrt(2.0)
    dct *= math.sqrt(2.0 / n_mels)
    return dct.T                                               # (n_mels, n_mfcc)


# -----------------------------------------------------------------------------
# Pallas kernel: framing + fused windowed rDFT + power + mel + log + DCT +
# per-utterance normalization for a block of Bt utterances.
# -----------------------------------------------------------------------------
def _mfcc_kernel(wave_ref, dft_ref, mel_ref, dct_ref, out_ref):
    bt, tp1, hop = wave_ref.shape                              # (Bt, T+1, hop)
    t = tp1 - 1
    n_out = out_ref.shape[-1]                                  # padded to 128
    fpad = mel_ref.shape[0]                                    # lane-aligned n_freq

    chunks = wave_ref[...]                                     # f32 (Bt, T+1, hop)
    # hop = n_fft/2  =>  frame t = [chunk t | chunk t+1].  Build the frames by
    # lane-concat (hop is a multiple of 128 -> free vreg placement), flatten
    # (Bt, T) -> Bt*T rows to fill the MXU M-dim.
    # NOTE: the +1 sublane offset on `right` may cost a sublane-shift copy;
    # only worth feeding via a second (offset) BlockSpec if XLU saturates.
    left = chunks[:, :t, :].reshape(bt * t, hop).astype(jnp.bfloat16)
    right = chunks[:, 1:, :].reshape(bt * t, hop).astype(jnp.bfloat16)
    frames = jnp.concatenate([left, right], axis=-1)           # (Bt*T, n_fft) bf16

    # One fused windowed-rDFT matmul: K = n_fft, N = 2*Fpad ([re | im]),
    # f32 accumulate.  K=N=256 fills the v6e/v7x 256x256 MXU tile.
    y = jnp.dot(frames, dft_ref[...], preferred_element_type=jnp.float32)
    re = y[:, :fpad]                                           # 128-aligned slices
    im = y[:, fpad:]
    power = re * re + im * im                                  # f32 (Bt*T, Fpad)

    # Mel filterbank + log (torchaudio log_mels=True -> log(x + 1e-6)), f32.
    mel = jnp.dot(power, mel_ref[...], preferred_element_type=jnp.float32)
    log_mel = jnp.log(mel + 1e-6)                              # (Bt*T, n_mels)

    # DCT-II (ortho), columns zero-padded to n_out lanes -> lane-dense MFCC.
    mfcc = jnp.dot(log_mel, dct_ref[...],
                   preferred_element_type=jnp.float32)          # (Bt*T, n_out)

    # Per-utterance, per-coefficient normalization over the time axis
    # (matches PyTorch: mean over dim=1; torch.std is unbiased / ddof=1).
    mfcc3 = mfcc.reshape(bt, t, n_out)
    mean = jnp.mean(mfcc3, axis=1, keepdims=True)
    centered = mfcc3 - mean
    denom = float(max(t - 1, 1))                               # guard T == 1
    std = jnp.sqrt(jnp.sum(centered * centered, axis=1, keepdims=True) / denom)
    out_ref[...] = centered / (std + 1e-5)                     # unmasked 128-lane store


# -----------------------------------------------------------------------------
# Wrapper
# -----------------------------------------------------------------------------
def audio_featurizer(waveforms, *, sample_rate, n_fft, n_mels, f_min, f_max):
    """waveforms: (B, S) float32  ->  (B, T, n_mfcc=n_mels) float32.

    Implements the spec_width=None path of AudioFeaturizer (hop = n_fft // 2,
    center=False, log_mels=True, n_mfcc = n_mels).
    """
    waveforms = jnp.asarray(waveforms, dtype=jnp.float32)
    B, S = waveforms.shape
    assert n_fft % 2 == 0 and S >= n_fft
    hop = n_fft // 2
    n_mfcc = n_mels
    T = 1 + (S - n_fft) // hop                                 # center=False

    # ---- fixed transforms, frequency & output axes made lane-aligned -------
    n_freq_full = n_fft // 2 + 1
    mel_full = _mel_filterbank(n_freq_full, n_mels, sample_rate, f_min, f_max)
    # Drop trailing all-zero filterbank rows (the Nyquist bin has zero weight
    # whenever f_max <= sr/2), then zero-pad frequencies up to a lane multiple.
    nz = np.nonzero(np.any(mel_full > 0.0, axis=1))[0]
    n_freq_r = int(nz[-1]) + 1 if nz.size else 1
    n_freq_pad = ((n_freq_r + 127) // 128) * 128

    cos_full, sin_full = _windowed_dft(n_fft, n_freq_full)
    # Pack [cos | sin] into a single (n_fft, 2*Fpad) bf16 weight matrix.
    dft_np = np.zeros((n_fft, 2 * n_freq_pad), dtype=np.float32)
    dft_np[:, :n_freq_r] = cos_full[:, :n_freq_r]
    dft_np[:, n_freq_pad:n_freq_pad + n_freq_r] = sin_full[:, :n_freq_r]
    dft_w = jnp.asarray(dft_np, dtype=jnp.bfloat16)

    mel_np = np.zeros((n_freq_pad, n_mels), dtype=np.float32)
    mel_np[:n_freq_r] = mel_full[:n_freq_r]
    mel_fb = jnp.asarray(mel_np)

    # DCT with output columns zero-padded to a lane multiple (>=128) so the
    # MFCC block, normalization and output store are lane-dense; padded
    # coefficients are exactly zero and sliced off in the wrapper.
    n_out_pad = max(128, ((n_mfcc + 127) // 128) * 128)
    dct_np = np.zeros((n_mels, n_out_pad), dtype=np.float32)
    dct_np[:, :n_mfcc] = _dct_matrix(n_mfcc, n_mels)
    dct_m = jnp.asarray(dct_np)

    # ---- VMEM budget: generation-aware (v7x has only 64 MiB physical) ------
    try:
        vmem_cap = int(pltpu.get_tpu_info().vmem_capacity_bytes)
    except Exception:                                          # pragma: no cover
        vmem_cap = 64 * 1024 * 1024                            # v7x-safe fallback
    # ~40 MiB on v7x (64 MiB), ~80 MiB on v5e/v6e (128 MiB).
    vmem_limit = min(vmem_cap * 5 // 8, 100 * 1024 * 1024)
    vmem_budget = vmem_limit - 8 * 1024 * 1024                 # compiler headroom

    def _vmem_est(bt_):
        rows = bt_ * T
        const = 2 * (n_fft * 2 * n_freq_pad * 2                # packed DFT (bf16)
                     + n_freq_pad * n_mels * 4                 # mel fb (f32)
                     + n_mels * n_out_pad * 4)                 # DCT (f32)
        io = 2 * bt_ * (T + 1) * hop * 4 + 2 * bt_ * T * n_out_pad * 4
        inter = (2 * rows * n_fft * 2                          # left/right/frames bf16
                 + 3 * rows * n_freq_pad * 4                   # y (re|im) + power f32
                 + 2 * rows * n_mels * 4                       # mel, log_mel
                 + 3 * rows * n_out_pad * 4)                   # mfcc, centered, out
        return const + io + inter

    # ---- batch tiling: ~2048 MXU rows per step, inside the VMEM budget -----
    row_target = 2048
    bt = max(1, min(B, max(1, row_target // max(T, 1))))
    while bt > 1 and _vmem_est(bt) > vmem_budget:
        bt //= 2
    if B >= 2:
        bt = min(bt, max(1, B // 2))       # keep >= 2 grid steps (v7x: 2 TCs)
    # Prefer a bt that divides B: avoids materializing a zero-padded copy of
    # the whole waveform in HBM.  Fall back to tail-padding only if the best
    # divisor is far below the target (rare, e.g. large prime B).
    bt_div = bt
    while B % bt_div:
        bt_div -= 1
    if 4 * bt_div >= bt:
        bt = bt_div
    b_pad = pl.cdiv(B, bt) * bt
    # TODO(synk): for very long utterances (T in the thousands, bt=1 still over
    # budget) add a T-tile grid axis ("arbitrary") with streaming mean /
    # sum-of-squares in scratch, finalized under pl.when on the last T step.

    # Free, contiguous reshape; framing itself happens inside the kernel.
    wave = waveforms[:, : (T + 1) * hop].reshape(B, T + 1, hop)
    if b_pad != B:
        wave = jnp.pad(wave, ((0, b_pad - B), (0, 0), (0, 0)))

    rows_total = b_pad * T
    cost = pl.CostEstimate(
        flops=2 * rows_total * (n_fft * 2 * n_freq_pad
                                + n_freq_pad * n_mels
                                + n_mels * n_out_pad),
        transcendentals=rows_total * n_mels,                   # the log
        bytes_accessed=(b_pad * (T + 1) * hop * 4              # waveform in
                        + b_pad * T * n_out_pad * 4            # features out
                        + n_fft * 2 * n_freq_pad * 2           # constants
                        + n_freq_pad * n_mels * 4
                        + n_mels * n_out_pad * 4),
    )

    out = pl.pallas_call(
        _mfcc_kernel,
        out_shape=jax.ShapeDtypeStruct((b_pad, T, n_out_pad), jnp.float32),
        grid=(b_pad // bt,),
        in_specs=[
            pl.BlockSpec((bt, T + 1, hop), lambda b: (b, 0, 0)),
            # Constant operands: block index never changes, so Pallas DMAs
            # them once; they are tiny at n_fft=256.  Revisit single-buffering
            # (pl.Buffered(1)) for n_fft >= 1024 to halve their VMEM footprint.
            pl.BlockSpec((n_fft, 2 * n_freq_pad), lambda b: (0, 0)),
            pl.BlockSpec((n_freq_pad, n_mels), lambda b: (0, 0)),
            pl.BlockSpec((n_mels, n_out_pad), lambda b: (0, 0)),
        ],
        out_specs=pl.BlockSpec((bt, T, n_out_pad), lambda b: (b, 0, 0)),
        compiler_params=pltpu.CompilerParams(
            dimension_semantics=("parallel",),
            vmem_limit_bytes=vmem_limit),
        cost_estimate=cost,
    )(wave, dft_w, mel_fb, dct_m)
    return out[:B, :, :n_mfcc]


if __name__ == "__main__":
    # Deterministic example consistent with the module's forward:
    # sample_rate=16000, n_fft=256, n_mels=32, f_min=0, f_max=8000,
    # spec_width=None -> hop = 128.  2176 samples -> 16 time frames.
    sample_rate = 16000
    n_fft = 256
    n_mels = 32
    f_min = 0.0
    f_max = 8000.0

    B = 2
    S = n_fft + 15 * (n_fft // 2)                              # 2176 -> T = 16

    key = jax.random.PRNGKey(0)
    waveforms = jax.random.normal(key, (B, S), dtype=jnp.float32) * 0.1

    feat = audio_featurizer(
        waveforms,
        sample_rate=sample_rate,
        n_fft=n_fft,
        n_mels=n_mels,
        f_min=f_min,
        f_max=f_max,
    )
    feat = jax.block_until_ready(feat)
    assert feat.shape == (B, 16, n_mels), feat.shape
    assert bool(jnp.all(jnp.isfinite(feat)))
    print("KERNEL_OK")
</pallas_src>

<mosaic_0001>
module attributes {stable_mosaic.version = 11 : i64} {
  func.func @_mfcc_kernel(%arg0: i32, %arg1: memref<1x17x128xf32, #tpu.memory_space<vmem>>, %arg2: memref<256x512xbf16, #tpu.memory_space<vmem>>, %arg3: memref<256x32xf32, #tpu.memory_space<vmem>>, %arg4: memref<32x128xf32, #tpu.memory_space<vmem>>, %arg5: memref<1x16x128xf32, #tpu.memory_space<vmem>>) attributes {dimension_semantics = [#tpu.dimension_semantics<parallel>], iteration_bounds = array<i64: 2>, scalar_prefetch = 0 : i64, scratch_operands = 0 : i64, tpu.core_type = #tpu.core_type<tc>, window_params = [{transform_indices = @transform_0, window_bounds = array<i64: 1, 17, 128>}, {pipeline_mode = #tpu.pipeline_mode<synchronous>, transform_indices = @transform_1, window_bounds = array<i64: 256, 512>}, {pipeline_mode = #tpu.pipeline_mode<synchronous>, transform_indices = @transform_2, window_bounds = array<i64: 256, 32>}, {pipeline_mode = #tpu.pipeline_mode<synchronous>, transform_indices = @transform_3, window_bounds = array<i64: 32, 128>}, {transform_indices = @transform_4, window_bounds = array<i64: 1, 16, 128>}]} {
    %c0 = arith.constant 0 : index
    %c0_0 = arith.constant 0 : index
    %c0_1 = arith.constant 0 : index
    %0 = vector.load %arg1[%c0, %c0_0, %c0_1] : memref<1x17x128xf32, #tpu.memory_space<vmem>>, vector<1x17x128xf32>
    %1 = vector.extract_strided_slice %0 {offsets = [0, 0, 0], sizes = [1, 16, 128], strides = [1, 1, 1]} : vector<1x17x128xf32> to vector<1x16x128xf32>
    %2 = vector.shape_cast %1 : vector<1x16x128xf32> to vector<16x128xf32>
    %3 = arith.truncf %2 : vector<16x128xf32> to vector<16x128xbf16>
    %4 = vector.extract_strided_slice %0 {offsets = [0, 1, 0], sizes = [1, 16, 128], strides = [1, 1, 1]} : vector<1x17x128xf32> to vector<1x16x128xf32>
    %5 = vector.shape_cast %4 : vector<1x16x128xf32> to vector<16x128xf32>
    %6 = arith.truncf %5 : vector<16x128xf32> to vector<16x128xbf16>
    %7 = tpu.concatenate %3, %6 in 1 : vector<16x128xbf16>, vector<16x128xbf16> -> vector<16x256xbf16>
    %c0_2 = arith.constant 0 : index
    %c0_3 = arith.constant 0 : index
    %8 = vector.load %arg2[%c0_2, %c0_3] : memref<256x512xbf16, #tpu.memory_space<vmem>>, vector<256x512xbf16>
    %cst = arith.constant dense<0.000000e+00> : vector<16x512xf32>
    %9 = tpu.matmul %7, %8, %cst {dimension_numbers = #tpu.dot_dimension_numbers<[1], [0], [0], [1], [0, 0, 1, 1], [], []>} : vector<16x256xbf16>, vector<256x512xbf16>, vector<16x512xf32> -> vector<16x512xf32>
    %10 = vector.extract_strided_slice %9 {offsets = [0, 0], sizes = [16, 256], strides = [1, 1]} : vector<16x512xf32> to vector<16x256xf32>
    %11 = vector.extract_strided_slice %9 {offsets = [0, 256], sizes = [16, 256], strides = [1, 1]} : vector<16x512xf32> to vector<16x256xf32>
    %12 = arith.mulf %10, %10 : vector<16x256xf32>
    %13 = arith.mulf %11, %11 : vector<16x256xf32>
    %14 = arith.addf %12, %13 : vector<16x256xf32>
    %c0_4 = arith.constant 0 : index
    %c0_5 = arith.constant 0 : index
    %15 = vector.load %arg3[%c0_4, %c0_5] : memref<256x32xf32, #tpu.memory_space<vmem>>, vector<256x32xf32>
    %cst_6 = arith.constant dense<0.000000e+00> : vector<16x32xf32>
    %16 = tpu.matmul %14, %15, %cst_6 {dimension_numbers = #tpu.dot_dimension_numbers<[1], [0], [0], [1], [0, 0, 1, 1], [], []>} : vector<16x256xf32>, vector<256x32xf32>, vector<16x32xf32> -> vector<16x32xf32>
    %cst_7 = arith.constant 9.99999997E-7 : f32
    %17 = vector.broadcast %cst_7 : f32 to vector<16x32xf32>
    %18 = arith.addf %16, %17 : vector<16x32xf32>
    %19 = math.log %18 : vector<16x32xf32>
    %c0_8 = arith.constant 0 : index
    %c0_9 = arith.constant 0 : index
    %20 = vector.load %arg4[%c0_8, %c0_9] : memref<32x128xf32, #tpu.memory_space<vmem>>, vector<32x128xf32>
    %cst_10 = arith.constant dense<0.000000e+00> : vector<16x128xf32>
    %21 = tpu.matmul %19, %20, %cst_10 {dimension_numbers = #tpu.dot_dimension_numbers<[1], [0], [0], [1], [0, 0, 1, 1], [], []>} : vector<16x32xf32>, vector<32x128xf32>, vector<16x128xf32> -> vector<16x128xf32>
    %22 = vector.shape_cast %21 : vector<16x128xf32> to vector<1x16x128xf32>
    %cst_11 = arith.constant dense<0.000000e+00> : vector<1x128xf32>
    %23 = vector.multi_reduction <add>, %22, %cst_11 [1] : vector<1x16x128xf32> to vector<1x128xf32>
    %24 = vector.shape_cast %23 : vector<1x128xf32> to vector<1x1x128xf32>
    %cst_12 = arith.constant 1.600000e+01 : f32
    %25 = vector.broadcast %cst_12 : f32 to vector<1x1x128xf32>
    %26 = arith.divf %24, %25 : vector<1x1x128xf32>
    %27 = vector.broadcast %26 : vector<1x1x128xf32> to vector<1x16x128xf32>
    %28 = arith.subf %22, %27 : vector<1x16x128xf32>
    %29 = arith.mulf %28, %28 : vector<1x16x128xf32>
    %cst_13 = arith.constant dense<0.000000e+00> : vector<1x128xf32>
    %30 = vector.multi_reduction <add>, %29, %cst_13 [1] : vector<1x16x128xf32> to vector<1x128xf32>
    %31 = vector.shape_cast %30 : vector<1x128xf32> to vector<1x1x128xf32>
    %cst_14 = arith.constant 1.500000e+01 : f32
    %32 = vector.broadcast %cst_14 : f32 to vector<1x1x128xf32>
    %33 = arith.divf %31, %32 : vector<1x1x128xf32>
    %34 = math.sqrt %33 : vector<1x1x128xf32>
    %cst_15 = arith.constant 9.99999974E-6 : f32
    %35 = vector.broadcast %cst_15 : f32 to vector<1x1x128xf32>
    %36 = arith.addf %34, %35 : vector<1x1x128xf32>
    %37 = vector.broadcast %36 : vector<1x1x128xf32> to vector<1x16x128xf32>
    %38 = arith.divf %28, %37 : vector<1x16x128xf32>
    %c0_16 = arith.constant 0 : index
    %c0_17 = arith.constant 0 : index
    %c0_18 = arith.constant 0 : index
    %39 = vector.load %arg5[%c0_16, %c0_17, %c0_18] : memref<1x16x128xf32, #tpu.memory_space<vmem>>, vector<1x16x128xf32>
    tpu.vector_store %arg5[%c0_16, %c0_17, %c0_18], %38 {strides = array<i32>} : memref<1x16x128xf32, #tpu.memory_space<vmem>>, vector<1x16x128xf32>,
    return
  }
  func.func @transform_0(%arg0: i32) -> (i32, i32, i32) {
    %c0_i32 = arith.constant 0 : i32
    %c0_i32_0 = arith.constant 0 : i32
    %c0_i32_1 = arith.constant 0 : i32
    return %arg0, %c0_i32, %c0_i32_0 : i32, i32, i32
  }
  func.func @transform_1(%arg0: i32) -> (i32, i32) {
    %c0_i32 = arith.constant 0 : i32
    %c0_i32_0 = arith.constant 0 : i32
    %c0_i32_1 = arith.constant 0 : i32
    return %c0_i32, %c0_i32_0 : i32, i32
  }
  func.func @transform_2(%arg0: i32) -> (i32, i32) {
    %c0_i32 = arith.constant 0 : i32
    %c0_i32_0 = arith.constant 0 : i32
    %c0_i32_1 = arith.constant 0 : i32
    return %c0_i32, %c0_i32_0 : i32, i32
  }
  func.func @transform_3(%arg0: i32) -> (i32, i32) {
    %c0_i32 = arith.constant 0 : i32
    %c0_i32_0 = arith.constant 0 : i32
    %c0_i32_1 = arith.constant 0 : i32
    return %c0_i32, %c0_i32_0 : i32, i32
  }
  func.func @transform_4(%arg0: i32) -> (i32, i32, i32) {
    %c0_i32 = arith.constant 0 : i32
    %c0_i32_0 = arith.constant 0 : i32
    %c0_i32_1 = arith.constant 0 : i32
    return %arg0, %c0_i32, %c0_i32_0 : i32, i32, i32
  }
}

</mosaic_0001>

<llo_original>
// kernel: tpu_custom_call.1
$region0: #{tpu_custom_call.1}
  #allocation0 [shape = 'u32[]', space=smem, size = 0x4, offset = 0x4, fixed_abs, tag = 'smem constant byte address 0x4 - core index']
  #allocation1 [shape = 'u32[72,128]{1,0:T(1,128)}', space=vmem, size = 0x9000, scoped, tag = 'internal scratch']
  %s0 = inlined_call_operand.vmem [shape: f32[2,17,128], index: 0, kind: input, shape index: {}]
  %s1 = inlined_call_operand.hbm [shape: bf16[256,512], index: 1, kind: input, shape index: {}]
  %s2 = inlined_call_operand.vmem [shape: f32[256,32], index: 2, kind: input, shape index: {}]
  %s3 = inlined_call_operand.vmem [shape: f32[32,128], index: 3, kind: input, shape index: {}]
  %s4 = inlined_call_operand.hbm [shape: f32[2,16,128], index: 4, kind: output, shape index: {}]
  %s5 = sld [smem:[#allocation0]]
  $region53: #{tpu_custom_call.1} parent=0
    _
  %s7 = ssub.s32 1, %s5
  %s8 = scalar_select 0, %s7, %s5
  $region1: #{tpu_custom_call.1} parent=0
    #allocation2 [shape = 'u8[262144]{0}', space=vmem, size = 0x40000, scoped, tag = 'input window, operand 1, single buffered']
    #allocation3 [shape = 's32[2]{0}', space=sflag, size = 0x8, scoped, tag = 'scoped memory for tpu_custom_call.1']
    #allocation4 [shape = 's32[2]{0}', space=sflag, size = 0x8, scoped, tag = 'scoped memory for tpu_custom_call.1']
    #allocation5 [shape = 'u8[16384]{0}', space=vmem, size = 0x4000, scoped, tag = 'output window, operand 0']
    %9 = vsyncpa [#allocation3], 0
    %10 = vsyncpa [#allocation4], 0
    %s11 = scalar_lea.sflag [#allocation4], 1
    %12 = vsyncpa %s11, 0
    loop: start=0, step=1, limit=4
    $region2: #{tpu_custom_call.1} parent=1 // loop_pre_header
      _
    $region3: #{tpu_custom_call.1} parent=1 // loop_header
      %s14 = sphi 0, %s18
      %p15 = scmp.ge.s32.totalorder %s14, 4
      %s24 = sphi 0, %s26
      %s27 = sphi 0, %s24
      %s28 = sphi 0, %s27
      %s44 = sphi 0, %s28
      %s48 = sphi 0, %s48
      %s50 = sphi 0, %s48
      %s51 = sphi 0, %s50
      %s65 = sphi 0, %s51
      %s69 = sphi 0, %s69
      %s71 = sphi 0, %s69
      %s72 = sphi 0, %s71
      %s86 = sphi 0, %s72
      %s90 = sphi 0, %s90
      %s92 = sphi 0, %s90
      %s93 = sphi 0, %s92
      %s107 = sphi 0, %s93
      %s113 = sphi 0, %s115
      %s116 = sphi 0, %s113
      %s117 = sphi 0, %s116
      %s133 = sphi 0, %s117
    $region4: #{tpu_custom_call.1} parent=1 // loop_header_branch
      %17 = sbr.rel (%p15) target = $region8
    $region5: #{tpu_custom_call.1} parent=1 // loop_body
      %s19 = ssub.s32 %s14, 1
      %s20 = ssub.s32 %s14, 2
      %s21 = sadd.s32 %s14, 1
      %s22 = ssub.s32 %s14, %s21
      %p23 = scmp.eq.s32.totalorder %s22, 0
      %s25 = sadd.s32 %s24, 1
      %s26 = scalar_select %p23, %s24, %s25
      %p29 = pneg %p23
      %p30 = scmp.eq.s32.totalorder %s14, 1
      %p31 = por %p29, %p30
      %p32 = scmp.ne.s32.totalorder %s24, %s27
      %p33 = scmp.eq.s32.totalorder %s14, 0
      %p34 = por %p32, %p33
      %p35 = scmp.ne.s32.totalorder %s24, %s27
      %p36 = scmp.eq.s32.totalorder %s19, 1
      %p37 = por %p35, %p36
      %p38 = scmp.ne.s32.totalorder %s27, %s28
      %p39 = scmp.eq.s32.totalorder %s19, 0
      %p40 = por %p38, %p39
      %p41 = scmp.ne.s32.totalorder %s27, %s28
      %p42 = scmp.eq.s32.totalorder %s20, 1
      %p43 = por %p41, %p42
      %p45 = scmp.ne.s32.totalorder %s28, %s44
      %p46 = scmp.eq.s32.totalorder %s20, 0
      %p47 = por %p45, %p46
      %s49 = sadd.s32 %s48, 1
      %p52 = scmp.eq.s32.totalorder %s14, 1
      %p53 = scmp.ne.s32.totalorder %s48, %s50
      %p54 = scmp.eq.s32.totalorder %s14, 0
      %p55 = por %p53, %p54
      %p56 = scmp.ne.s32.totalorder %s48, %s50
      %p57 = scmp.eq.s32.totalorder %s19, 1
      %p58 = por %p56, %p57
      %p59 = scmp.ne.s32.totalorder %s50, %s51
      %p60 = scmp.eq.s32.totalorder %s19, 0
      %p61 = por %p59, %p60
      %p62 = scmp.ne.s32.totalorder %s50, %s51
      %p63 = scmp.eq.s32.totalorder %s20, 1
      %p64 = por %p62, %p63
      %p66 = scmp.ne.s32.totalorder %s51, %s65
      %p67 = scmp.eq.s32.totalorder %s20, 0
      %p68 = por %p66, %p67
      %s70 = sadd.s32 %s69, 1
      %p73 = scmp.eq.s32.totalorder %s14, 1
      %p74 = scmp.ne.s32.totalorder %s69, %s71
      %p75 = scmp.eq.s32.totalorder %s14, 0
      %p76 = por %p74, %p75
      %p77 = scmp.ne.s32.totalorder %s69, %s71
      %p78 = scmp.eq.s32.totalorder %s19, 1
      %p79 = por %p77, %p78
      %p80 = scmp.ne.s32.totalorder %s71, %s72
      %p81 = scmp.eq.s32.totalorder %s19, 0
      %p82 = por %p80, %p81
      %p83 = scmp.ne.s32.totalorder %s71, %s72
      %p84 = scmp.eq.s32.totalorder %s20, 1
      %p85 = por %p83, %p84
      %p87 = scmp.ne.s32.totalorder %s72, %s86
      %p88 = scmp.eq.s32.totalorder %s20, 0
      %p89 = por %p87, %p88
      %s91 = sadd.s32 %s90, 1
      %p94 = scmp.eq.s32.totalorder %s14, 1
      %p95 = scmp.ne.s32.totalorder %s90, %s92
      %p96 = scmp.eq.s32.totalorder %s14, 0
      %p97 = por %p95, %p96
      %p98 = scmp.ne.s32.totalorder %s90, %s92
      %p99 = scmp.eq.s32.totalorder %s19, 1
      %p100 = por %p98, %p99
      %p101 = scmp.ne.s32.totalorder %s92, %s93
      %p102 = scmp.eq.s32.totalorder %s19, 0
      %p103 = por %p101, %p102
      %p104 = scmp.ne.s32.totalorder %s92, %s93
      %p105 = scmp.eq.s32.totalorder %s20, 1
      %p106 = por %p104, %p105
      %p108 = scmp.ne.s32.totalorder %s93, %s107
      %p109 = scmp.eq.s32.totalorder %s20, 0
      %p110 = por %p108, %p109
      %s111 = ssub.s32 %s14, %s21
      %p112 = scmp.eq.s32.totalorder %s111, 0
      %s114 = sadd.s32 %s113, 1
      %s115 = scalar_select %p112, %s113, %s114
      %p118 = pneg %p112
      %p119 = scmp.eq.s32.totalorder %s14, 1
      %p120 = por %p118, %p119
      %p121 = scmp.ne.s32.totalorder %s113, %s116
      %p122 = scmp.eq.s32.totalorder %s14, 0
      %p123 = por %p121, %p122
      %p124 = scmp.ne.s32.totalorder %s113, %s116
      %p125 = scmp.eq.s32.totalorder %s19, 1
      %p126 = por %p124, %p125
      %p127 = scmp.ne.s32.totalorder %s116, %s117
      %p128 = scmp.eq.s32.totalorder %s19, 0
      %p129 = por %p127, %p128
      %p130 = scmp.ne.s32.totalorder %s116, %s117
      %p131 = scmp.eq.s32.totalorder %s20, 1
      %p132 = por %p130, %p131
      %p134 = scmp.ne.s32.totalorder %s117, %s133
      %p135 = scmp.eq.s32.totalorder %s20, 0
      %p136 = por %p134, %p135
      %p137 = scmp.le.s32.totalorder 1, %s14
      %p138 = scmp.lt.s32.totalorder %s14, 3
      %p139 = pnand %p137, %p138
      %p140 = pneg %p139
      // Predicated region
      $region9: #{tpu_custom_call.1} parent=5 // pred_check
        _
      $region10: #{tpu_custom_call.1} parent=5 // pred_check_branch
        %142 = sbr.rel (%p139) target = $region12
      $region11: #{tpu_custom_call.1} parent=5 // pred_region
        %s143 = ssub.s32 %s14, 1
        // Predicated region
        $region13: #{tpu_custom_call.1} parent=11 // pred_check
          %p144 = pneg %p61
        $region14: #{tpu_custom_call.1} parent=11 // pred_check_branch
          %146 = sbr.rel (%p144) target = $region16
        $region15: #{tpu_custom_call.1} parent=11 // pred_region
          %148 = vsyncadd [#allocation3], 0
          %s149 = sshll.u32 %s1, 4
          %s150 = int_to_ptr.hbm [resolvable:$true] %s149
          %s151 = sshll.u32 [#allocation2], 4
          %s152 = int_to_ptr.vmem [resolvable:$true] %s151
          %157 = dma.hbm_to_vmem [thread:$0]  %s150, 8192, %s152, [#allocation3], 256, 256, 16
        $region16: #{tpu_custom_call.1} parent=11 // pred_fallthru
          _
        // Predicated region
        $region17: #{tpu_custom_call.1} parent=11 // pred_check
          %p158 = pneg %p82
        $region18: #{tpu_custom_call.1} parent=11 // pred_check_branch
          %160 = sbr.rel (%p158) target = $region20
        $region19: #{tpu_custom_call.1} parent=11 // pred_region
          _
        $region20: #{tpu_custom_call.1} parent=11 // pred_fallthru
          _
        // Predicated region
        $region21: #{tpu_custom_call.1} parent=11 // pred_check
          %p161 = pneg %p103
        $region22: #{tpu_custom_call.1} parent=11 // pred_check_branch
          %163 = sbr.rel (%p161) target = $region24
        $region23: #{tpu_custom_call.1} parent=11 // pred_region
          _
        $region24: #{tpu_custom_call.1} parent=11 // pred_fallthru
          _
      $region12: #{tpu_custom_call.1} parent=5 // pred_fallthru
        _
      %p164 = scmp.lt.s32.totalorder %s14, 2
      // Predicated region
      $region25: #{tpu_custom_call.1} parent=5 // pred_check
        %p165 = pneg %p164
      $region26: #{tpu_custom_call.1} parent=5 // pred_check_branch
        %167 = sbr.rel (%p165) target = $region28
      $region27: #{tpu_custom_call.1} parent=5 // pred_region
        // Predicated region
        $region29: #{tpu_custom_call.1} parent=27 // pred_check
          %p168 = pneg %p34
        $region30: #{tpu_custom_call.1} parent=27 // pred_check_branch
          %170 = sbr.rel (%p168) target = $region32
        $region31: #{tpu_custom_call.1} parent=27 // pred_region
          %p171 = scmp.lt.s32.totalorder %s14, 1
          %s172 = scalar_select %p171, %s14, 1
          %s173 = smul.addr %s172, 3
          %s174 = smul.addr %s173, 8
          %s175 = scalar_lea.vmem %s0, %s174
        $region32: #{tpu_custom_call.1} parent=27 // pred_fallthru
          _
      $region28: #{tpu_custom_call.1} parent=5 // pred_fallthru
        _
      %p176 = scmp.le.s32.totalorder 1, %s14
      %p177 = scmp.lt.s32.totalorder %s14, 3
      %p178 = pnand %p176, %p177
      %p179 = pneg %p178
      // Predicated region
      $region33: #{tpu_custom_call.1} parent=5 // pred_check
        _
      $region34: #{tpu_custom_call.1} parent=5 // pred_check_branch
        %181 = sbr.rel (%p178) target = $region36
      $region35: #{tpu_custom_call.1} parent=5 // pred_region
        %s182 = ssub.s32 %s14, 1
        // Predicated region
        $region37: #{tpu_custom_call.1} parent=35 // pred_check
          %p183 = pneg %p61
        $region38: #{tpu_custom_call.1} parent=35 // pred_check_branch
          %185 = sbr.rel (%p183) target = $region40
        $region39: #{tpu_custom_call.1} parent=35 // pred_region
          %187 = dma.done [#allocation3], 8192
        $region40: #{tpu_custom_call.1} parent=35 // pred_fallthru
          _
        %p188 = scmp.lt.s32.totalorder %s19, 1
        %s189 = scalar_select %p188, %s19, 1
        %s190 = smul.addr %s189, 3
        %s191 = smul.addr %s190, 8
        %s192 = scalar_lea.vmem %s0, %s191
        %p193 = pneg %p40
        %p194 = pneg %p37
        %p195 = pneg %p61
        %p196 = pneg %p58
        %p197 = pneg %p82
        %p198 = pneg %p79
        %p199 = pneg %p103
        %p200 = pneg %p100
        %p201 = pneg %p129
        %p202 = pneg %p126
        %s203 = sand.u32 %s116, 1
        %s204 = scalar_lea.sflag [#allocation4], %s203
        %s205 = sand.u32 %s116, 1
        %s206 = smul.addr %s205, 16
        %s207 = scalar_lea.vmem [#allocation5], %s206
        %p208 = scmp.lt.s32.totalorder %s19, 1
        %s209 = scalar_select %p208, %s19, 1
        %s210 = smul.addr %s209, 3
        %s211 = smul.addr %s210, 8
        %s212 = scalar_lea.vmem %s0, %s211
        %v213 = vld [vmem:[%s212] sm:$0xff]
        %v214 = vld [vmem:[%s212 + $0x8] sm:$0xff]
        %v215 = vld [vmem:[%s212 + $0x10] sm:$0x1]
        %v216 = vpack.c.bf16 %v213, %v213
        %v217 = vpack.c.bf16 %v214, %v214
        %v218 = vpack.c.bf16 %v215, %v215
        %v221 = vunpack.c.l.b16 %v216
        %v222 = vunpack.c.l.b16 %v217
        %v223 = vpack.c.b16 %v222, %v221
        %v226 = vunpack.c.l.b16 %v218
        %v227 = vpack.c.b16 %v226, %v226
        %vm228 = vsmask.f32 7424
        %v230 = vshrl.u32 %v223, 16
        %v232 = vshll.u32 %v223, 16
        %v234 = vrot.slane %v232, 1
        %v235 = vor.u32 %v230, %v234
        %v237 = vshll.u32 %v227, 16
        %v239 = vrot.slane %v237, 1
        %v240 = vsel %vm228, %v235, %v239
        %v242 = vld [vmem:[#allocation2] sm:$0xff]
        %v243 = vld [vmem:[#allocation2 + $0x8] sm:$0xff]
        %v244 = vld [vmem:[#allocation2 + $0x10] sm:$0xff]
        %v245 = vld [vmem:[#allocation2 + $0x18] sm:$0xff]
        %v246 = vld [vmem:[#allocation2 + $0x20] sm:$0xff]
        %v247 = vld [vmem:[#allocation2 + $0x28] sm:$0xff]
        %v248 = vld [vmem:[#allocation2 + $0x30] sm:$0xff]
        %v249 = vld [vmem:[#allocation2 + $0x38] sm:$0xff]
        %v250 = vld [vmem:[#allocation2 + $0x40] sm:$0xff]
        %v251 = vld [vmem:[#allocation2 + $0x48] sm:$0xff]
        %v252 = vld [vmem:[#allocation2 + $0x50] sm:$0xff]
        %v253 = vld [vmem:[#allocation2 + $0x58] sm:$0xff]
        %v254 = vld [vmem:[#allocation2 + $0x60] sm:$0xff]
        %v255 = vld [vmem:[#allocation2 + $0x68] sm:$0xff]
        %v256 = vld [vmem:[#allocation2 + $0x70] sm:$0xff]
        %v257 = vld [vmem:[#allocation2 + $0x78] sm:$0xff]
        %v258 = vld [vmem:[#allocation2 + $0x80] sm:$0xff]
        %v259 = vld [vmem:[#allocation2 + $0x88] sm:$0xff]
        %v260 = vld [vmem:[#allocation2 + $0x90] sm:$0xff]
        %v261 = vld [vmem:[#allocation2 + $0x98] sm:$0xff]
        %v262 = vld [vmem:[#allocation2 + $0xa0] sm:$0xff]
        %v263 = vld [vmem:[#allocation2 + $0xa8] sm:$0xff]
        %v264 = vld [vmem:[#allocation2 + $0xb0] sm:$0xff]
        %v265 = vld [vmem:[#allocation2 + $0xb8] sm:$0xff]
        %v266 = vld [vmem:[#allocation2 + $0xc0] sm:$0xff]
        %v267 = vld [vmem:[#allocation2 + $0xc8] sm:$0xff]
        %v268 = vld [vmem:[#allocation2 + $0xd0] sm:$0xff]
        %v269 = vld [vmem:[#allocation2 + $0xd8] sm:$0xff]
        %v270 = vld [vmem:[#allocation2 + $0xe0] sm:$0xff]
        %v271 = vld [vmem:[#allocation2 + $0xe8] sm:$0xff]
        %v272 = vld [vmem:[#allocation2 + $0xf0] sm:$0xff]
        %v273 = vld [vmem:[#allocation2 + $0xf8] sm:$0xff]
        %v274 = vld [vmem:[#allocation2 + $0x100] sm:$0xff]
        %v275 = vld [vmem:[#allocation2 + $0x108] sm:$0xff]
        %v276 = vld [vmem:[#allocation2 + $0x110] sm:$0xff]
        %v277 = vld [vmem:[#allocation2 + $0x118] sm:$0xff]
        %v278 = vld [vmem:[#allocation2 + $0x120] sm:$0xff]
        %v279 = vld [vmem:[#allocation2 + $0x128] sm:$0xff]
        %v280 = vld [vmem:[#allocation2 + $0x130] sm:$0xff]
        %v281 = vld [vmem:[#allocation2 + $0x138] sm:$0xff]
        %v282 = vld [vmem:[#allocation2 + $0x140] sm:$0xff]
        %v283 = vld [vmem:[#allocation2 + $0x148] sm:$0xff]
        %v284 = vld [vmem:[#allocation2 + $0x150] sm:$0xff]
        %v285 = vld [vmem:[#allocation2 + $0x158] sm:$0xff]
        %v286 = vld [vmem:[#allocation2 + $0x160] sm:$0xff]
        %v287 = vld [vmem:[#allocation2 + $0x168] sm:$0xff]
        %v288 = vld [vmem:[#allocation2 + $0x170] sm:$0xff]
        %v289 = vld [vmem:[#allocation2 + $0x178] sm:$0xff]
        %v290 = vld [vmem:[#allocation2 + $0x180] sm:$0xff]
        %v291 = vld [vmem:[#allocation2 + $0x188] sm:$0xff]
        %v292 = vld [vmem:[#allocation2 + $0x190] sm:$0xff]
        %v293 = vld [vmem:[#allocation2 + $0x198] sm:$0xff]
        %v294 = vld [vmem:[#allocation2 + $0x1a0] sm:$0xff]
        %v295 = vld [vmem:[#allocation2 + $0x1a8] sm:$0xff]
        %v296 = vld [vmem:[#allocation2 + $0x1b0] sm:$0xff]
        %v297 = vld [vmem:[#allocation2 + $0x1b8] sm:$0xff]
        %v298 = vld [vmem:[#allocation2 + $0x1c0] sm:$0xff]
        %v299 = vld [vmem:[#allocation2 + $0x1c8] sm:$0xff]
        %v300 = vld [vmem:[#allocation2 + $0x1d0] sm:$0xff]
        %v301 = vld [vmem:[#allocation2 + $0x1d8] sm:$0xff]
        %v302 = vld [vmem:[#allocation2 + $0x1e0] sm:$0xff]
        %v303 = vld [vmem:[#allocation2 + $0x1e8] sm:$0xff]
        %v304 = vld [vmem:[#allocation2 + $0x1f0] sm:$0xff]
        %v305 = vld [vmem:[#allocation2 + $0x1f8] sm:$0xff]
        %v370 = vunpack.c.l.b16 %v242
        %v371 = vunpack.c.h.b16 %v242
        %v372 = vunpack.c.l.b16 %v243
        %v373 = vunpack.c.h.b16 %v243
        %v374 = vunpack.c.l.b16 %v244
        %v375 = vunpack.c.h.b16 %v244
        %v376 = vunpack.c.l.b16 %v245
        %v377 = vunpack.c.h.b16 %v245
        %v378 = vunpack.c.l.b16 %v246
        %v379 = vunpack.c.h.b16 %v246
        %v380 = vunpack.c.l.b16 %v247
        %v381 = vunpack.c.h.b16 %v247
        %v382 = vunpack.c.l.b16 %v248
        %v383 = vunpack.c.h.b16 %v248
        %v384 = vunpack.c.l.b16 %v249
        %v385 = vunpack.c.h.b16 %v249
        %v386 = vunpack.c.l.b16 %v250
        %v387 = vunpack.c.h.b16 %v250
        %v388 = vunpack.c.l.b16 %v251
        %v389 = vunpack.c.h.b16 %v251
        %v390 = vunpack.c.l.b16 %v252
        %v391 = vunpack.c.h.b16 %v252
        %v392 = vunpack.c.l.b16 %v253
        %v393 = vunpack.c.h.b16 %v253
        %v394 = vunpack.c.l.b16 %v254
        %v395 = vunpack.c.h.b16 %v254
        %v396 = vunpack.c.l.b16 %v255
        %v397 = vunpack.c.h.b16 %v255
        %v398 = vunpack.c.l.b16 %v256
        %v399 = vunpack.c.h.b16 %v256
        %v400 = vunpack.c.l.b16 %v257
        %v401 = vunpack.c.h.b16 %v257
        %v402 = vunpack.c.l.b16 %v258
        %v403 = vunpack.c.h.b16 %v258
        %v404 = vunpack.c.l.b16 %v259
        %v405 = vunpack.c.h.b16 %v259
        %v406 = vunpack.c.l.b16 %v260
        %v407 = vunpack.c.h.b16 %v260
        %v408 = vunpack.c.l.b16 %v261
        %v409 = vunpack.c.h.b16 %v261
        %v410 = vunpack.c.l.b16 %v262
        %v411 = vunpack.c.h.b16 %v262
        %v412 = vunpack.c.l.b16 %v263
        %v413 = vunpack.c.h.b16 %v263
        %v414 = vunpack.c.l.b16 %v264
        %v415 = vunpack.c.h.b16 %v264
        %v416 = vunpack.c.l.b16 %v265
        %v417 = vunpack.c.h.b16 %v265
        %v418 = vunpack.c.l.b16 %v266
        %v419 = vunpack.c.h.b16 %v266
        %v420 = vunpack.c.l.b16 %v267
        %v421 = vunpack.c.h.b16 %v267
        %v422 = vunpack.c.l.b16 %v268
        %v423 = vunpack.c.h.b16 %v268
        %v424 = vunpack.c.l.b16 %v269
        %v425 = vunpack.c.h.b16 %v269
        %v426 = vunpack.c.l.b16 %v270
        %v427 = vunpack.c.h.b16 %v270
        %v428 = vunpack.c.l.b16 %v271
        %v429 = vunpack.c.h.b16 %v271
        %v430 = vunpack.c.l.b16 %v272
        %v431 = vunpack.c.h.b16 %v272
        %v432 = vunpack.c.l.b16 %v273
        %v433 = vunpack.c.h.b16 %v273
        %v434 = vunpack.c.l.b16 %v274
        %v435 = vunpack.c.h.b16 %v274
        %v436 = vunpack.c.l.b16 %v275
        %v437 = vunpack.c.h.b16 %v275
        %v438 = vunpack.c.l.b16 %v276
        %v439 = vunpack.c.h.b16 %v276
        %v440 = vunpack.c.l.b16 %v277
        %v441 = vunpack.c.h.b16 %v277
        %v442 = vunpack.c.l.b16 %v278
        %v443 = vunpack.c.h.b16 %v278
        %v444 = vunpack.c.l.b16 %v279
        %v445 = vunpack.c.h.b16 %v279
        %v446 = vunpack.c.l.b16 %v280
        %v447 = vunpack.c.h.b16 %v280
        %v448 = vunpack.c.l.b16 %v281
        %v449 = vunpack.c.h.b16 %v281
        %v450 = vunpack.c.l.b16 %v282
        %v451 = vunpack.c.h.b16 %v282
        %v452 = vunpack.c.l.b16 %v283
        %v453 = vunpack.c.h.b16 %v283
        %v454 = vunpack.c.l.b16 %v284
        %v455 = vunpack.c.h.b16 %v284
        %v456 = vunpack.c.l.b16 %v285
        %v457 = vunpack.c.h.b16 %v285
        %v458 = vunpack.c.l.b16 %v286
        %v459 = vunpack.c.h.b16 %v286
        %v460 = vunpack.c.l.b16 %v287
        %v461 = vunpack.c.h.b16 %v287
        %v462 = vunpack.c.l.b16 %v288
        %v463 = vunpack.c.h.b16 %v288
        %v464 = vunpack.c.l.b16 %v289
        %v465 = vunpack.c.h.b16 %v289
        %v466 = vunpack.c.l.b16 %v290
        %v467 = vunpack.c.h.b16 %v290
        %v468 = vunpack.c.l.b16 %v291
        %v469 = vunpack.c.h.b16 %v291
        %v470 = vunpack.c.l.b16 %v292
        %v471 = vunpack.c.h.b16 %v292
        %v472 = vunpack.c.l.b16 %v293
        %v473 = vunpack.c.h.b16 %v293
        %v474 = vunpack.c.l.b16 %v294
        %v475 = vunpack.c.h.b16 %v294
        %v476 = vunpack.c.l.b16 %v295
        %v477 = vunpack.c.h.b16 %v295
        %v478 = vunpack.c.l.b16 %v296
        %v479 = vunpack.c.h.b16 %v296
        %v480 = vunpack.c.l.b16 %v297
        %v481 = vunpack.c.h.b16 %v297
        %v482 = vunpack.c.l.b16 %v298
        %v483 = vunpack.c.h.b16 %v298
        %v484 = vunpack.c.l.b16 %v299
        %v485 = vunpack.c.h.b16 %v299
        %v486 = vunpack.c.l.b16 %v300
        %v487 = vunpack.c.h.b16 %v300
        %v488 = vunpack.c.l.b16 %v301
        %v489 = vunpack.c.h.b16 %v301
        %v490 = vunpack.c.l.b16 %v302
        %v491 = vunpack.c.h.b16 %v302
        %v492 = vunpack.c.l.b16 %v303
        %v493 = vunpack.c.h.b16 %v303
        %v494 = vunpack.c.l.b16 %v304
        %v495 = vunpack.c.h.b16 %v304
        %v496 = vunpack.c.l.b16 %v305
        %v497 = vunpack.c.h.b16 %v305
        %v498 = vpack.c.b16 %v374, %v370
        %v499 = vpack.c.b16 %v375, %v371
        %v500 = vpack.c.b16 %v376, %v372
        %v501 = vpack.c.b16 %v377, %v373
        %v502 = vpack.c.b16 %v382, %v378
        %v503 = vpack.c.b16 %v383, %v379
        %v504 = vpack.c.b16 %v384, %v380
        %v505 = vpack.c.b16 %v385, %v381
        %v506 = vpack.c.b16 %v390, %v386
        %v507 = vpack.c.b16 %v391, %v387
        %v508 = vpack.c.b16 %v392, %v388
        %v509 = vpack.c.b16 %v393, %v389
        %v510 = vpack.c.b16 %v398, %v394
        %v511 = vpack.c.b16 %v399, %v395
        %v512 = vpack.c.b16 %v400, %v396
        %v513 = vpack.c.b16 %v401, %v397
        %v514 = vpack.c.b16 %v406, %v402
        %v515 = vpack.c.b16 %v407, %v403
        %v516 = vpack.c.b16 %v408, %v404
        %v517 = vpack.c.b16 %v409, %v405
        %v518 = vpack.c.b16 %v414, %v410
        %v519 = vpack.c.b16 %v415, %v411
        %v520 = vpack.c.b16 %v416, %v412
        %v521 = vpack.c.b16 %v417, %v413
        %v522 = vpack.c.b16 %v422, %v418
        %v523 = vpack.c.b16 %v423, %v419
        %v524 = vpack.c.b16 %v424, %v420
        %v525 = vpack.c.b16 %v425, %v421
        %v526 = vpack.c.b16 %v430, %v426
        %v527 = vpack.c.b16 %v431, %v427
        %v528 = vpack.c.b16 %v432, %v428
        %v529 = vpack.c.b16 %v433, %v429
        %v530 = vpack.c.b16 %v438, %v434
        %v531 = vpack.c.b16 %v439, %v435
        %v532 = vpack.c.b16 %v440, %v436
        %v533 = vpack.c.b16 %v441, %v437
        %v534 = vpack.c.b16 %v446, %v442
        %v535 = vpack.c.b16 %v447, %v443
        %v536 = vpack.c.b16 %v448, %v444
        %v537 = vpack.c.b16 %v449, %v445
        %v538 = vpack.c.b16 %v454, %v450
        %v539 = vpack.c.b16 %v455, %v451
        %v540 = vpack.c.b16 %v456, %v452
        %v541 = vpack.c.b16 %v457, %v453
        %v542 = vpack.c.b16 %v462, %v458
        %v543 = vpack.c.b16 %v463, %v459
        %v544 = vpack.c.b16 %v464, %v460
        %v545 = vpack.c.b16 %v465, %v461
        %v546 = vpack.c.b16 %v470, %v466
        %v547 = vpack.c.b16 %v471, %v467
        %v548 = vpack.c.b16 %v472, %v468
        %v549 = vpack.c.b16 %v473, %v469
        %v550 = vpack.c.b16 %v478, %v474
        %v551 = vpack.c.b16 %v479, %v475
        %v552 = vpack.c.b16 %v480, %v476
        %v553 = vpack.c.b16 %v481, %v477
        %v554 = vpack.c.b16 %v486, %v482
        %v555 = vpack.c.b16 %v487, %v483
        %v556 = vpack.c.b16 %v488, %v484
        %v557 = vpack.c.b16 %v489, %v485
        %v558 = vpack.c.b16 %v494, %v490
        %v559 = vpack.c.b16 %v495, %v491
        %v560 = vpack.c.b16 %v496, %v492
        %v561 = vpack.c.b16 %v497, %v493
        %626 = vmatpush.bf16.msra.mxu0 %v526
        %627 = vmatpush.bf16.msra.mxu0 %v522
        %628 = vmatpush.bf16.msra.mxu0 %v518
        %629 = vmatpush.bf16.msra.mxu0 %v514
        %630 = vmatpush.bf16.msra.mxu0 %v510
        %631 = vmatpush.bf16.msra.mxu0 %v506
        %632 = vmatpush.bf16.msra.mxu0 %v502
        %633 = vmatpush.bf16.msra.mxu0 %v498
        %634 = vmatmul.bf16.gmra.mxu0 %v223
        %v635 = vpop.f32.mrf.mxu0
        %v636 = vadd.f32 0.0, %v635
        %v637 = vpop.f32.mrf.mxu0
        %v638 = vadd.f32 0.0, %v637
        %639 = vdwg.mxu0
        %640 = vmatpush.bf16.msra.mxu0 %v558
        %641 = vmatpush.bf16.msra.mxu0 %v554
        %642 = vmatpush.bf16.msra.mxu0 %v550
        %643 = vmatpush.bf16.msra.mxu0 %v546
        %644 = vmatpush.bf16.msra.mxu0 %v542
        %645 = vmatpush.bf16.msra.mxu0 %v538
        %646 = vmatpush.bf16.msra.mxu0 %v534
        %647 = vmatpush.bf16.msra.mxu0 %v530
        %648 = vmatmul.bf16.gmra.mxu0 %v240
        %v649 = vpop.f32.mrf.mxu0
        %v650 = vadd.f32 %v636, %v649
        %v651 = vpop.f32.mrf.mxu0
        %v652 = vadd.f32 %v638, %v651
        %653 = vdwg.mxu0
        %654 = vmatpush.bf16.msra.mxu0 %v527
        %655 = vmatpush.bf16.msra.mxu0 %v523
        %656 = vmatpush.bf16.msra.mxu0 %v519
        %657 = vmatpush.bf16.msra.mxu0 %v515
        %658 = vmatpush.bf16.msra.mxu0 %v511
        %659 = vmatpush.bf16.msra.mxu0 %v507
        %660 = vmatpush.bf16.msra.mxu0 %v503
        %661 = vmatpush.bf16.msra.mxu0 %v499
        %662 = vmatmul.bf16.gmra.mxu0 %v223
        %v663 = vpop.f32.mrf.mxu0
        %v664 = vadd.f32 0.0, %v663
        %v665 = vpop.f32.mrf.mxu0
        %v666 = vadd.f32 0.0, %v665
        %667 = vdwg.mxu0
        %668 = vmatpush.bf16.msra.mxu0 %v559
        %669 = vmatpush.bf16.msra.mxu0 %v555
        %670 = vmatpush.bf16.msra.mxu0 %v551
        %671 = vmatpush.bf16.msra.mxu0 %v547
        %672 = vmatpush.bf16.msra.mxu0 %v543
        %673 = vmatpush.bf16.msra.mxu0 %v539
        %674 = vmatpush.bf16.msra.mxu0 %v535
        %675 = vmatpush.bf16.msra.mxu0 %v531
        %676 = vmatmul.bf16.gmra.mxu0 %v240
        %v677 = vpop.f32.mrf.mxu0
        %v678 = vadd.f32 %v664, %v677
        %v679 = vpop.f32.mrf.mxu0
        %v680 = vadd.f32 %v666, %v679
        %681 = vdwg.mxu0
        %682 = vmatpush.bf16.msra.mxu0 %v528
        %683 = vmatpush.bf16.msra.mxu0 %v524
        %684 = vmatpush.bf16.msra.mxu0 %v520
        %685 = vmatpush.bf16.msra.mxu0 %v516
        %686 = vmatpush.bf16.msra.mxu0 %v512
        %687 = vmatpush.bf16.msra.mxu0 %v508
        %688 = vmatpush.bf16.msra.mxu0 %v504
        %689 = vmatpush.bf16.msra.mxu0 %v500
        %690 = vmatmul.bf16.gmra.mxu0 %v223
        %v691 = vpop.f32.mrf.mxu0
        %v692 = vadd.f32 0.0, %v691
        %v693 = vpop.f32.mrf.mxu0
        %v694 = vadd.f32 0.0, %v693
        %695 = vdwg.mxu0
        %696 = vmatpush.bf16.msra.mxu0 %v560
        %697 = vmatpush.bf16.msra.mxu0 %v556
        %698 = vmatpush.bf16.msra.mxu0 %v552
        %699 = vmatpush.bf16.msra.mxu0 %v548
        %700 = vmatpush.bf16.msra.mxu0 %v544
        %701 = vmatpush.bf16.msra.mxu0 %v540
        %702 = vmatpush.bf16.msra.mxu0 %v536
        %703 = vmatpush.bf16.msra.mxu0 %v532
        %704 = vmatmul.bf16.gmra.mxu0 %v240
        %v705 = vpop.f32.mrf.mxu0
        %v706 = vadd.f32 %v692, %v705
        %v707 = vpop.f32.mrf.mxu0
        %v708 = vadd.f32 %v694, %v707
        %709 = vdwg.mxu0
        %710 = vmatpush.bf16.msra.mxu0 %v529
        %711 = vmatpush.bf16.msra.mxu0 %v525
        %712 = vmatpush.bf16.msra.mxu0 %v521
        %713 = vmatpush.bf16.msra.mxu0 %v517
        %714 = vmatpush.bf16.msra.mxu0 %v513
        %715 = vmatpush.bf16.msra.mxu0 %v509
        %716 = vmatpush.bf16.msra.mxu0 %v505
        %717 = vmatpush.bf16.msra.mxu0 %v501
        %718 = vmatmul.bf16.gmra.mxu0 %v223
        %v719 = vpop.f32.mrf.mxu0
        %v720 = vadd.f32 0.0, %v719
        %v721 = vpop.f32.mrf.mxu0
        %v722 = vadd.f32 0.0, %v721
        %723 = vdwg.mxu0
        %724 = vmatpush.bf16.msra.mxu0 %v561
        %725 = vmatpush.bf16.msra.mxu0 %v557
        %726 = vmatpush.bf16.msra.mxu0 %v553
        %727 = vmatpush.bf16.msra.mxu0 %v549
        %728 = vmatpush.bf16.msra.mxu0 %v545
        %729 = vmatpush.bf16.msra.mxu0 %v541
        %730 = vmatpush.bf16.msra.mxu0 %v537
        %731 = vmatpush.bf16.msra.mxu0 %v533
        %732 = vmatmul.bf16.gmra.mxu0 %v240
        %v733 = vpop.f32.mrf.mxu0
        %v734 = vadd.f32 %v720, %v733
        %v735 = vpop.f32.mrf.mxu0
        %v736 = vadd.f32 %v722, %v735
        %737 = vdwg.mxu0
        %v738 = vmul.f32 %v650, %v650
        %v739 = vmul.f32 %v678, %v678
        %v740 = vmul.f32 %v652, %v652
        %v741 = vmul.f32 %v680, %v680
        %v742 = vmul.f32 %v706, %v706
        %v743 = vmul.f32 %v734, %v734
        %v744 = vmul.f32 %v708, %v708
        %v745 = vmul.f32 %v736, %v736
        %v746 = vadd.f32 %v738, %v742
        %v747 = vadd.f32 %v739, %v743
        %v748 = vadd.f32 %v740, %v744
        %v749 = vadd.f32 %v741, %v745
        %v750 = vld [vmem:[%s2] sm:$0xff]
        %v751 = vld [vmem:[%s2 + $0x8] sm:$0xff]
        %v752 = vld [vmem:[%s2 + $0x10] sm:$0xff]
        %v753 = vld [vmem:[%s2 + $0x18] sm:$0xff]
        %v754 = vld [vmem:[%s2 + $0x20] sm:$0xff]
        %v755 = vld [vmem:[%s2 + $0x28] sm:$0xff]
        %v756 = vld [vmem:[%s2 + $0x30] sm:$0xff]
        %v757 = vld [vmem:[%s2 + $0x38] sm:$0xff]
        %v758 = vld [vmem:[%s2 + $0x40] sm:$0xff]
        %v759 = vld [vmem:[%s2 + $0x48] sm:$0xff]
        %v760 = vld [vmem:[%s2 + $0x50] sm:$0xff]
        %v761 = vld [vmem:[%s2 + $0x58] sm:$0xff]
        %v762 = vld [vmem:[%s2 + $0x60] sm:$0xff]
        %v763 = vld [vmem:[%s2 + $0x68] sm:$0xff]
        %v764 = vld [vmem:[%s2 + $0x70] sm:$0xff]
        %v765 = vld [vmem:[%s2 + $0x78] sm:$0xff]
        %v766 = vld [vmem:[%s2 + $0x80] sm:$0xff]
        %v767 = vld [vmem:[%s2 + $0x88] sm:$0xff]
        %v768 = vld [vmem:[%s2 + $0x90] sm:$0xff]
        %v769 = vld [vmem:[%s2 + $0x98] sm:$0xff]
        %v770 = vld [vmem:[%s2 + $0xa0] sm:$0xff]
        %v771 = vld [vmem:[%s2 + $0xa8] sm:$0xff]
        %v772 = vld [vmem:[%s2 + $0xb0] sm:$0xff]
        %v773 = vld [vmem:[%s2 + $0xb8] sm:$0xff]
        %v774 = vld [vmem:[%s2 + $0xc0] sm:$0xff]
        %v775 = vld [vmem:[%s2 + $0xc8] sm:$0xff]
        %v776 = vld [vmem:[%s2 + $0xd0] sm:$0xff]
        %v777 = vld [vmem:[%s2 + $0xd8] sm:$0xff]
        %v778 = vld [vmem:[%s2 + $0xe0] sm:$0xff]
        %v779 = vld [vmem:[%s2 + $0xe8] sm:$0xff]
        %v780 = vld [vmem:[%s2 + $0xf0] sm:$0xff]
        %v781 = vld [vmem:[%s2 + $0xf8] sm:$0xff]
        %782 = vmatpush.msra.mxu0 %v765
        %783 = vmatpush.msra.mxu0 %v764
        %784 = vmatpush.msra.mxu0 %v763
        %785 = vmatpush.msra.mxu0 %v762
        %786 = vmatpush.msra.mxu0 %v761
        %787 = vmatpush.msra.mxu0 %v760
        %788 = vmatpush.msra.mxu0 %v759
        %789 = vmatpush.msra.mxu0 %v758
        %790 = vmatpush.msra.mxu0 %v757
        %791 = vmatpush.msra.mxu0 %v756
        %792 = vmatpush.msra.mxu0 %v755
        %793 = vmatpush.msra.mxu0 %v754
        %794 = vmatpush.msra.mxu0 %v753
        %795 = vmatpush.msra.mxu0 %v752
        %796 = vmatpush.msra.mxu0 %v751
        %797 = vmatpush.msra.mxu0 %v750
        %798 = vmatmul.f32.gmra.mxu0 %v746
        %v799 = vpop.f32.mrf.mxu0
        %v800 = vadd.f32 1e-06, %v799
        %801 = vmatmul.f32.gmra.mxu0 %v748
        %v802 = vpop.f32.mrf.mxu0
        %v803 = vadd.f32 1e-06, %v802
        %804 = vdwg.mxu0
        %805 = vmatpush.msra.mxu0 %v781
        %806 = vmatpush.msra.mxu0 %v780
        %807 = vmatpush.msra.mxu0 %v779
        %808 = vmatpush.msra.mxu0 %v778
        %809 = vmatpush.msra.mxu0 %v777
        %810 = vmatpush.msra.mxu0 %v776
        %811 = vmatpush.msra.mxu0 %v775
        %812 = vmatpush.msra.mxu0 %v774
        %813 = vmatpush.msra.mxu0 %v773
        %814 = vmatpush.msra.mxu0 %v772
        %815 = vmatpush.msra.mxu0 %v771
        %816 = vmatpush.msra.mxu0 %v770
        %817 = vmatpush.msra.mxu0 %v769
        %818 = vmatpush.msra.mxu0 %v768
        %819 = vmatpush.msra.mxu0 %v767
        %820 = vmatpush.msra.mxu0 %v766
        %821 = vmatmul.f32.gmra.mxu0 %v747
        %v822 = vpop.f32.mrf.mxu0
        %v823 = vadd.f32 %v800, %v822
        %824 = vmatmul.f32.gmra.mxu0 %v749
        %v825 = vpop.f32.mrf.mxu0
        %v826 = vadd.f32 %v803, %v825
        %827 = vdwg.mxu0
        %v828 = vlog2.pop %v823
        %v829 = vmul.f32 %v828, 0.6931472
        %v830 = vlog2.pop %v826
        %v831 = vmul.f32 %v830, 0.6931472
        %v832 = vld [vmem:[%s3] sm:$0xff]
        %v833 = vld [vmem:[%s3 + $0x8] sm:$0xff]
        %v834 = vld [vmem:[%s3 + $0x10] sm:$0xff]
        %v835 = vld [vmem:[%s3 + $0x18] sm:$0xff]
        %vm836 = vcmask 261120
        %v838 = vsel %vm836, %v829, 0
        %v841 = vsel %vm836, %v831, 0
        %843 = vmatpush.msra.mxu0 0.0
        %844 = vmatpush.msra.mxu0 0.0
        %845 = vmatpush.msra.mxu0 0.0
        %846 = vmatpush.msra.mxu0 0.0
        %847 = vmatpush.msra.mxu0 0.0
        %848 = vmatpush.msra.mxu0 0.0
        %849 = vmatpush.msra.mxu0 0.0
        %850 = vmatpush.msra.mxu0 0.0
        %851 = vmatpush.msra.mxu0 0.0
        %852 = vmatpush.msra.mxu0 0.0
        %853 = vmatpush.msra.mxu0 0.0
        %854 = vmatpush.msra.mxu0 0.0
        %855 = vmatpush.msra.mxu0 %v835
        %856 = vmatpush.msra.mxu0 %v834
        %857 = vmatpush.msra.mxu0 %v833
        %858 = vmatpush.msra.mxu0 %v832
        %859 = vmatmul.f32.gmra.mxu0 %v838
        %v860 = vpop.f32.mrf.mxu0
        %v861 = vadd.f32 0.0, %v860
        %862 = vmatmul.f32.gmra.mxu0 %v841
        %v863 = vpop.f32.mrf.mxu0
        %v864 = vadd.f32 0.0, %v863
        %865 = vdwg.mxu0
        %v866 = vadd.f32 %v861, %v864
        %v867 = vrot.slane %v866, 4
        %v868 = vadd.f32 %v866, %v867
        %v869 = vrot.slane %v868, 2
        %v870 = vadd.f32 %v868, %v869
        %v871 = vrot.slane %v870, 1
        %v872 = vadd.f32 %v870, %v871
        %v873 = vrcp.pop 16.0
        %v874 = vmul.f32 16.0, %v873
        %v875 = vsub.f32 1.0, %v874
        %v876 = vmul.f32 %v873, %v875
        %v877 = vadd.f32 %v873, %v876
        %vm878 = vweird.f32 %v873
        %v879 = vsel %vm878, %v873, %v877
        %v880 = vmul.f32 %v872, %v879
        %v881 = vsub.f32 %v861, %v880
        %v882 = vsub.f32 %v864, %v880
        %v883 = vmul.f32 %v881, %v881
        %v884 = vmul.f32 %v882, %v882
        %v885 = vadd.f32 %v883, %v884
        %v886 = vrot.slane %v885, 4
        %v887 = vadd.f32 %v885, %v886
        %v888 = vrot.slane %v887, 2
        %v889 = vadd.f32 %v887, %v888
        %v890 = vrot.slane %v889, 1
        %v891 = vadd.f32 %v889, %v890
        %v892 = vrcp.pop 15.0
        %v893 = vmul.f32 15.0, %v892
        %v894 = vsub.f32 1.0, %v893
        %v895 = vmul.f32 %v892, %v894
        %v896 = vadd.f32 %v892, %v895
        %vm897 = vweird.f32 %v892
        %v898 = vsel %vm897, %v892, %v896
        %v899 = vmul.f32 %v891, %v898
        %v900 = vrsqrt.pop %v899
        %v901 = vmul.f32 %v900, %v899
        %v902 = vmul.f32 %v901, %v900
        %v903 = vmul.f32 0.5, %v902
        %v904 = vsub.f32 1.5, %v903
        %v905 = vmul.f32 %v900, %v904
        %v906 = vmul.f32 %v899, %v905
        %vm907 = vcmp.eq.f32.partialorder %v899, inf
        %v908 = vsel %vm907, %v899, %v906
        %vm909 = vcmp.eq.f32.partialorder %v899, 0.0
        %v910 = vand.u32 %v899, 2147483648
        %v911 = vsel %vm909, %v910, %v908
        %v912 = vadd.f32 %v911, 1e-05
        %v913 = vrcp.pop %v912
        %v914 = vmul.f32 %v912, %v913
        %v915 = vsub.f32 1.0, %v914
        %v916 = vmul.f32 %v913, %v915
        %v917 = vadd.f32 %v913, %v916
        %vm918 = vweird.f32 %v912
        %vm919 = vweird.f32 %v913
        %vm920 = vmor %vm918, %vm919
        %v921 = vsel %vm920, %v913, %v917
        %v922 = vand.u32 2147483647, %v912
        %vm923 = vcmp.eq.f32.partialorder %v922, 8.507059e+37
        %v924 = vand.u32 %v912, 2147483648
        %v925 = vor.u32 1.1754944e-38, %v924
        %v926 = vsel %vm923, %v925, %v921
        %v927 = vmul.f32 %v881, %v926
        %v928 = vmul.f32 %v882, %v926
        %929 = vst [vmem:[%s207] sm:$0xff] %v927
        %930 = vst [vmem:[%s207 + $0x8] sm:$0xff] %v928
        %s931 = sand.u32 %s116, 1
        %s932 = scalar_lea.sflag [#allocation4], %s931
        %s933 = sand.u32 %s116, 1
        %s934 = smul.addr %s933, 16
        %s935 = scalar_lea.vmem [#allocation5], %s934
        // Predicated region
        $region41: #{tpu_custom_call.1} parent=35 // pred_check
          %p936 = pneg %p126
        $region42: #{tpu_custom_call.1} parent=35 // pred_check_branch
          %938 = sbr.rel (%p936) target = $region44
        $region43: #{tpu_custom_call.1} parent=35 // pred_region
          %940 = vsyncadd %s932, 0
          %s941 = smul.addr %s19, 2
          %s942 = smul.addr %s941, 8
          %s943 = scalar_lea.hbm %s4, %s942
          %s944 = sshll.u32 %s935, 4
          %s945 = int_to_ptr.vmem [resolvable:$true] %s944
          %s946 = sshll.u32 %s943, 4
          %s947 = int_to_ptr.hbm [resolvable:$true] %s946
          %952 = dma.vmem_to_hbm [thread:$0]  %s945, 256, %s947, %s932, 128, 128, 8
        $region44: #{tpu_custom_call.1} parent=35 // pred_fallthru
          _
      $region36: #{tpu_custom_call.1} parent=5 // pred_fallthru
        _
      %p953 = scmp.le.s32.totalorder 2, %s14
      // Predicated region
      $region45: #{tpu_custom_call.1} parent=5 // pred_check
        %p954 = pneg %p953
      $region46: #{tpu_custom_call.1} parent=5 // pred_check_branch
        %956 = sbr.rel (%p954) target = $region48
      $region47: #{tpu_custom_call.1} parent=5 // pred_region
        %s957 = ssub.s32 %s14, 2
        // Predicated region
        $region49: #{tpu_custom_call.1} parent=47 // pred_check
          %p958 = pneg %p132
        $region50: #{tpu_custom_call.1} parent=47 // pred_check_branch
          %960 = sbr.rel (%p958) target = $region52
        $region51: #{tpu_custom_call.1} parent=47 // pred_region
          %s961 = sand.u32 %s117, 1
          %s962 = scalar_lea.sflag [#allocation4], %s961
          %s963 = sand.u32 %s117, 1
          %s964 = smul.addr %s963, 16
          %s965 = scalar_lea.vmem [#allocation5], %s964
          %967 = dma.done %s962, 256
        $region52: #{tpu_custom_call.1} parent=47 // pred_fallthru
          _
      $region48: #{tpu_custom_call.1} parent=5 // pred_fallthru
        _
    $region6: #{tpu_custom_call.1} parent=1 // loop_footer
      %s18 = sadd.s32 1, %s14
    $region7: #{tpu_custom_call.1} parent=1 // loop_footer_branch
      %13 = sbr.rel target = $region3
    $region8: #{tpu_custom_call.1} parent=1 // loop_exit
      _
    %968 = vsyncpa [#allocation3], 1
    %s969 = scalar_lea.sflag [#allocation3], 1
    %970 = vsyncpa %s969, 1
    %971 = vsyncpa [#allocation4], 1
    %s972 = scalar_lea.sflag [#allocation4], 1
    %973 = vsyncpa %s972, 1

</llo_original>
